<compile_context>
chip_gen: v6e
topology: v6e:2x2x1
jax: 0.10.0
libtpu: 0.0.40
codegen_flags: <defaults>
</compile_context>

<pallas_src>
import functools

import jax
import jax.numpy as jnp
import numpy as np
from jax import lax
from jax.experimental import pallas as pl
from jax.experimental.pallas import tpu as pltpu


def _encoder_block_kernel(p_ref, w_ref, b_ref, g_ref, bt_ref, o_ref,
                          *, eps, slope):
    # p_ref : (1, K*K*Cin, HW)   im2col patches for this sample (lane dim = HW)
    # w_ref : (Cout, K*K*Cin)    conv weights, flattened (cin, kh, kw) order
    # b_ref : (Cout, 1)          conv bias
    # g_ref : (Cout, HW)         LayerNorm gamma (NCHW-flat)
    # bt_ref: (Cout, HW)         LayerNorm beta  (NCHW-flat)
    # o_ref : (1, Cout, HW)      output, lane-dense, NCHW-flat

    # Conv as one MXU matmul with f32 accumulation.
    acc = jnp.dot(w_ref[...], p_ref[0],
                  preferred_element_type=jnp.float32)          # (Cout, HW)
    acc = acc + b_ref[...]                                     # (Cout,1) bcast

    # LayerNorm over every element of this sample (matches nn.LayerNorm((C,H,W))).
    mean = jnp.mean(acc, keepdims=True)                        # (1,1)
    d = acc - mean
    var = jnp.mean(d * d, keepdims=True)                       # (1,1)
    inv = lax.rsqrt(var + eps)                                 # EUP slot
    y = d * inv * g_ref[...] + bt_ref[...]

    # LeakyReLU(0.1)
    y = jnp.where(y > 0, y, slope * y)
    o_ref[0] = y.astype(o_ref.dtype)


def encoder_block_pallas(x_nchw, w_oihw, bias, gamma_chw, beta_chw, stride=1,
                         eps=1e-5, slope=0.1):
    N, Cin, H, W = x_nchw.shape
    Cout, Cin_w, K, K2 = w_oihw.shape
    assert Cin_w == Cin and K == K2
    p = K // 2
    Ho = (H + 2 * p - K) // stride + 1
    Wo = (W + 2 * p - K) // stride + 1
    HW = Ho * Wo
    KKC = K * K * Cin
    assert gamma_chw.shape == (Cout, Ho, Wo), "LayerNorm shape must match conv output"

    # --- Glue (outside the kernel): im2col with stride baked in ---------------
    xpad = jnp.pad(x_nchw, ((0, 0), (0, 0), (p, p), (p, p)))   # (N, Cin, Hp, Wp)
    span_h = stride * (Ho - 1) + 1
    span_w = stride * (Wo - 1) + 1
    cols = []
    for kh in range(K):
        for kw in range(K):
            sl = xpad[:, :, kh:kh + span_h:stride, kw:kw + span_w:stride]
            cols.append(sl)                                    # (N, Cin, Ho, Wo)
    # axis order (cin, kh, kw) to match w_oihw.reshape(Cout, Cin*K*K)
    patches = jnp.stack(cols, axis=2).reshape(N, KKC, HW)      # lane dim = HW

    w2 = w_oihw.reshape(Cout, KKC)
    b2 = bias.reshape(Cout, 1)
    gamma2 = gamma_chw.reshape(Cout, HW)                       # already NCHW-flat
    beta2 = beta_chw.reshape(Cout, HW)

    kernel = functools.partial(_encoder_block_kernel, eps=eps, slope=slope)

    out = pl.pallas_call(
        kernel,
        out_shape=jax.ShapeDtypeStruct((N, Cout, HW), x_nchw.dtype),
        grid_spec=pltpu.PrefetchScalarGridSpec(
            num_scalar_prefetch=0,
            grid=(N,),                                         # one sample per step
            in_specs=[
                pl.BlockSpec((1, KKC, HW), lambda n: (n, 0, 0)),
                pl.BlockSpec((Cout, KKC), lambda n: (0, 0)),
                pl.BlockSpec((Cout, 1), lambda n: (0, 0)),
                pl.BlockSpec((Cout, HW), lambda n: (0, 0)),
                pl.BlockSpec((Cout, HW), lambda n: (0, 0)),
            ],
            out_specs=pl.BlockSpec((1, Cout, HW), lambda n: (n, 0, 0)),
        ),
        compiler_params=pltpu.CompilerParams(
            dimension_semantics=("parallel",)),
    )(patches, w2, b2, gamma2, beta2)

    # Lane-dense output is already (N, Cout, Ho*Wo) == NCHW flattened.
    return out.reshape(N, Cout, Ho, Wo)


def encoder_block_ref(x_nchw, w_oihw, bias, gamma_chw, beta_chw, stride=1,
                      eps=1e-5, slope=0.1):
    """Pure-JAX reference mirroring the PyTorch module."""
    K = w_oihw.shape[-1]
    p = K // 2
    y = lax.conv_general_dilated(
        x_nchw, w_oihw, window_strides=(stride, stride),
        padding=[(p, p), (p, p)],
        dimension_numbers=("NCHW", "OIHW", "NCHW"))
    y = y + bias[None, :, None, None]
    mean = y.mean(axis=(1, 2, 3), keepdims=True)
    var = ((y - mean) ** 2).mean(axis=(1, 2, 3), keepdims=True)
    y = (y - mean) / jnp.sqrt(var + eps) * gamma_chw[None] + beta_chw[None]
    return jnp.where(y > 0, y, slope * y)


def _run_case(key, N, Cin, Cout, K, stride, img):
    p = K // 2
    Ho = (img + 2 * p - K) // stride + 1
    Wo = Ho
    k_x, k_w, k_b, k_g, k_bt = jax.random.split(key, 5)
    x = jax.random.normal(k_x, (N, Cin, img, img), jnp.float32)
    w = jax.random.normal(k_w, (Cout, Cin, K, K), jnp.float32) * 0.1
    b = jax.random.normal(k_b, (Cout,), jnp.float32) * 0.1
    gamma = 1.0 + 0.1 * jax.random.normal(k_g, (Cout, Ho, Wo), jnp.float32)
    beta = 0.1 * jax.random.normal(k_bt, (Cout, Ho, Wo), jnp.float32)

    out = encoder_block_pallas(x, w, b, gamma, beta, stride=stride)
    out = jax.block_until_ready(out)
    ref = encoder_block_ref(x, w, b, gamma, beta, stride=stride)
    np.testing.assert_allclose(np.asarray(out), np.asarray(ref),
                               rtol=1e-4, atol=1e-4)


if __name__ == "__main__":
    # Module config: encoder_block(input_channels=4, output_channels=8,
    #                              kernel_size=3, stride=1, img_size=16)
    # (stride=1 so conv output spatial == img_size, matching LN1's shape.)
    key = jax.random.PRNGKey(0)
    k1, k2 = jax.random.split(key)
    _run_case(k1, N=2, Cin=4, Cout=8, K=3, stride=1, img=16)
    # Second stride=1 config to exercise different channel counts.
    _run_case(k2, N=2, Cin=8, Cout=16, K=3, stride=1, img=16)
    print("KERNEL_OK")
</pallas_src>

<mosaic_0001>
module attributes {stable_mosaic.version = 11 : i64} {
  func.func @_encoder_block_kernel(%arg0: i32, %arg1: memref<1x36x256xf32, #tpu.memory_space<vmem>>, %arg2: memref<8x36xf32, #tpu.memory_space<vmem>>, %arg3: memref<8x1xf32, #tpu.memory_space<vmem>>, %arg4: memref<8x256xf32, #tpu.memory_space<vmem>>, %arg5: memref<8x256xf32, #tpu.memory_space<vmem>>, %arg6: memref<1x8x256xf32, #tpu.memory_space<vmem>>) attributes {dimension_semantics = [#tpu.dimension_semantics<parallel>], iteration_bounds = array<i64: 2>, scalar_prefetch = 0 : i64, scratch_operands = 0 : i64, tpu.core_type = #tpu.core_type<tc>, window_params = [{transform_indices = @transform_0, window_bounds = array<i64: 1, 36, 256>}, {pipeline_mode = #tpu.pipeline_mode<synchronous>, transform_indices = @transform_1, window_bounds = array<i64: 8, 36>}, {pipeline_mode = #tpu.pipeline_mode<synchronous>, transform_indices = @transform_2, window_bounds = array<i64: 8, 1>}, {pipeline_mode = #tpu.pipeline_mode<synchronous>, transform_indices = @transform_3, window_bounds = array<i64: 8, 256>}, {pipeline_mode = #tpu.pipeline_mode<synchronous>, transform_indices = @transform_4, window_bounds = array<i64: 8, 256>}, {transform_indices = @transform_5, window_bounds = array<i64: 1, 8, 256>}]} {
    %c0 = arith.constant 0 : index
    %c0_0 = arith.constant 0 : index
    %0 = vector.load %arg2[%c0, %c0_0] : memref<8x36xf32, #tpu.memory_space<vmem>>, vector<8x36xf32>
    %c0_1 = arith.constant 0 : index
    %c0_2 = arith.constant 0 : index
    %c0_3 = arith.constant 0 : index
    %1 = vector.load %arg1[%c0_1, %c0_2, %c0_3] : memref<1x36x256xf32, #tpu.memory_space<vmem>>, vector<1x36x256xf32>
    %2 = vector.shape_cast %1 : vector<1x36x256xf32> to vector<36x256xf32>
    %cst = arith.constant dense<0.000000e+00> : vector<8x256xf32>
    %3 = tpu.matmul %0, %2, %cst {dimension_numbers = #tpu.dot_dimension_numbers<[1], [0], [0], [1], [0, 0, 1, 1], [], []>} : vector<8x36xf32>, vector<36x256xf32>, vector<8x256xf32> -> vector<8x256xf32>
    %c0_4 = arith.constant 0 : index
    %c0_5 = arith.constant 0 : index
    %4 = vector.load %arg3[%c0_4, %c0_5] : memref<8x1xf32, #tpu.memory_space<vmem>>, vector<8x1xf32>
    %5 = vector.broadcast %4 : vector<8x1xf32> to vector<8x256xf32>
    %6 = arith.addf %3, %5 : vector<8x256xf32>
    %7 = vector.shape_cast %6 : vector<8x256xf32> to vector<1x8x256xf32>
    %cst_6 = arith.constant dense<0.000000e+00> : vector<1xf32>
    %8 = vector.multi_reduction <add>, %7, %cst_6 [1, 2] : vector<1x8x256xf32> to vector<1xf32>
    %9 = vector.shape_cast %8 : vector<1xf32> to vector<1x1x1xf32>
    %10 = vector.extract %9[0, 0, 0] : f32 from vector<1x1x1xf32>
    %11 = vector.broadcast %10 : f32 to vector<1x1xf32>
    %cst_7 = arith.constant 2.048000e+03 : f32
    %12 = vector.broadcast %cst_7 : f32 to vector<1x1xf32>
    %13 = arith.divf %11, %12 : vector<1x1xf32>
    %14 = vector.broadcast %13 : vector<1x1xf32> to vector<8x256xf32>
    %15 = arith.subf %6, %14 : vector<8x256xf32>
    %16 = arith.mulf %15, %15 : vector<8x256xf32>
    %17 = vector.shape_cast %16 : vector<8x256xf32> to vector<1x8x256xf32>
    %cst_8 = arith.constant dense<0.000000e+00> : vector<1xf32>
    %18 = vector.multi_reduction <add>, %17, %cst_8 [1, 2] : vector<1x8x256xf32> to vector<1xf32>
    %19 = vector.shape_cast %18 : vector<1xf32> to vector<1x1x1xf32>
    %20 = vector.extract %19[0, 0, 0] : f32 from vector<1x1x1xf32>
    %21 = vector.broadcast %20 : f32 to vector<1x1xf32>
    %cst_9 = arith.constant 2.048000e+03 : f32
    %22 = vector.broadcast %cst_9 : f32 to vector<1x1xf32>
    %23 = arith.divf %21, %22 : vector<1x1xf32>
    %cst_10 = arith.constant 9.99999974E-6 : f32
    %24 = vector.broadcast %cst_10 : f32 to vector<1x1xf32>
    %25 = arith.addf %23, %24 : vector<1x1xf32>
    %26 = math.rsqrt %25 : vector<1x1xf32>
    %27 = vector.broadcast %26 : vector<1x1xf32> to vector<8x256xf32>
    %28 = arith.mulf %15, %27 : vector<8x256xf32>
    %c0_11 = arith.constant 0 : index
    %c0_12 = arith.constant 0 : index
    %29 = vector.load %arg4[%c0_11, %c0_12] : memref<8x256xf32, #tpu.memory_space<vmem>>, vector<8x256xf32>
    %30 = arith.mulf %28, %29 : vector<8x256xf32>
    %c0_13 = arith.constant 0 : index
    %c0_14 = arith.constant 0 : index
    %31 = vector.load %arg5[%c0_13, %c0_14] : memref<8x256xf32, #tpu.memory_space<vmem>>, vector<8x256xf32>
    %32 = arith.addf %30, %31 : vector<8x256xf32>
    %cst_15 = arith.constant 0.000000e+00 : f32
    %33 = vector.broadcast %cst_15 : f32 to vector<8x256xf32>
    %34 = arith.cmpf ogt, %32, %33 : vector<8x256xf32>
    %cst_16 = arith.constant 1.000000e-01 : f32
    %35 = vector.broadcast %cst_16 : f32 to vector<8x256xf32>
    %36 = arith.mulf %35, %32 : vector<8x256xf32>
    %37 = arith.select %34, %32, %36 : vector<8x256xi1>, vector<8x256xf32>
    %c0_17 = arith.constant 0 : index
    %c0_18 = arith.constant 0 : index
    %c0_19 = arith.constant 0 : index
    %38 = vector.load %arg6[%c0_17, %c0_18, %c0_19] : memref<1x8x256xf32, #tpu.memory_space<vmem>>, vector<1x8x256xf32>
    %39 = vector.shape_cast %38 : vector<1x8x256xf32> to vector<8x256xf32>
    %40 = vector.shape_cast %37 : vector<8x256xf32> to vector<1x8x256xf32>
    tpu.vector_store %arg6[%c0_17, %c0_18, %c0_19], %40 {strides = array<i32>} : memref<1x8x256xf32, #tpu.memory_space<vmem>>, vector<1x8x256xf32>,
    return
  }
  func.func @transform_0(%arg0: i32) -> (i32, i32, i32) {
    %c0_i32 = arith.constant 0 : i32
    %c0_i32_0 = arith.constant 0 : i32
    %c0_i32_1 = arith.constant 0 : i32
    return %arg0, %c0_i32, %c0_i32_0 : i32, i32, i32
  }
  func.func @transform_1(%arg0: i32) -> (i32, i32) {
    %c0_i32 = arith.constant 0 : i32
    %c0_i32_0 = arith.constant 0 : i32
    %c0_i32_1 = arith.constant 0 : i32
    return %c0_i32, %c0_i32_0 : i32, i32
  }
  func.func @transform_2(%arg0: i32) -> (i32, i32) {
    %c0_i32 = arith.constant 0 : i32
    %c0_i32_0 = arith.constant 0 : i32
    %c0_i32_1 = arith.constant 0 : i32
    return %c0_i32, %c0_i32_0 : i32, i32
  }
  func.func @transform_3(%arg0: i32) -> (i32, i32) {
    %c0_i32 = arith.constant 0 : i32
    %c0_i32_0 = arith.constant 0 : i32
    %c0_i32_1 = arith.constant 0 : i32
    return %c0_i32, %c0_i32_0 : i32, i32
  }
  func.func @transform_4(%arg0: i32) -> (i32, i32) {
    %c0_i32 = arith.constant 0 : i32
    %c0_i32_0 = arith.constant 0 : i32
    %c0_i32_1 = arith.constant 0 : i32
    return %c0_i32, %c0_i32_0 : i32, i32
  }
  func.func @transform_5(%arg0: i32) -> (i32, i32, i32) {
    %c0_i32 = arith.constant 0 : i32
    %c0_i32_0 = arith.constant 0 : i32
    %c0_i32_1 = arith.constant 0 : i32
    return %arg0, %c0_i32, %c0_i32_0 : i32, i32, i32
  }
}

</mosaic_0001>

<llo_original>
// kernel: tpu_custom_call.1
$region0: #{tpu_custom_call.1}
  #allocation0 [shape = 'u32[]', space=smem, size = 0x4, offset = 0x4, fixed_abs, tag = 'smem constant byte address 0x4 - core index']
  #allocation1 [shape = 'u32[144,128]{1,0:T(1,128)}', space=vmem, size = 0x12000, scoped, tag = 'internal scratch']
  %s0 = inlined_call_operand.vmem [shape: f32[2,36,256], index: 0, kind: input, shape index: {}]
  %s1 = inlined_call_operand.vmem [shape: f32[8,36], index: 1, kind: input, shape index: {}]
  %s2 = inlined_call_operand.vmem [shape: f32[8,1], index: 2, kind: input, shape index: {}]
  %s3 = inlined_call_operand.vmem [shape: f32[8,256], index: 3, kind: input, shape index: {}]
  %s4 = inlined_call_operand.vmem [shape: f32[8,256], index: 4, kind: input, shape index: {}]
  %s5 = inlined_call_operand.hbm [shape: f32[2,8,256], index: 5, kind: output, shape index: {}]
  %s6 = sld [smem:[#allocation0]]
  $region53: #{tpu_custom_call.1} parent=0
    _
  %s8 = ssub.s32 1, %s6
  %s9 = scalar_select 0, %s8, %s6
  $region1: #{tpu_custom_call.1} parent=0
    #allocation2 [shape = 'u8[16384]{0}', space=vmem, size = 0x4000, scoped, tag = 'output window, operand 0']
    #allocation3 [shape = 's32[2]{0}', space=sflag, size = 0x8, scoped, tag = 'scoped memory for tpu_custom_call.1']
    %10 = vsyncpa [#allocation3], 0
    %s11 = scalar_lea.sflag [#allocation3], 1
    %12 = vsyncpa %s11, 0
    loop: start=0, step=1, limit=4
    $region2: #{tpu_custom_call.1} parent=1 // loop_pre_header
      _
    $region3: #{tpu_custom_call.1} parent=1 // loop_header
      %s14 = sphi 0, %s18
      %p15 = scmp.ge.s32.totalorder %s14, 4
      %s24 = sphi 0, %s26
      %s27 = sphi 0, %s24
      %s28 = sphi 0, %s27
      %s44 = sphi 0, %s28
      %s48 = sphi 0, %s48
      %s50 = sphi 0, %s48
      %s51 = sphi 0, %s50
      %s65 = sphi 0, %s51
      %s69 = sphi 0, %s69
      %s71 = sphi 0, %s69
      %s72 = sphi 0, %s71
      %s86 = sphi 0, %s72
      %s90 = sphi 0, %s90
      %s92 = sphi 0, %s90
      %s93 = sphi 0, %s92
      %s107 = sphi 0, %s93
      %s111 = sphi 0, %s111
      %s113 = sphi 0, %s111
      %s114 = sphi 0, %s113
      %s128 = sphi 0, %s114
      %s134 = sphi 0, %s136
      %s137 = sphi 0, %s134
      %s138 = sphi 0, %s137
      %s154 = sphi 0, %s138
    $region4: #{tpu_custom_call.1} parent=1 // loop_header_branch
      %17 = sbr.rel (%p15) target = $region8
    $region5: #{tpu_custom_call.1} parent=1 // loop_body
      %s19 = ssub.s32 %s14, 1
      %s20 = ssub.s32 %s14, 2
      %s21 = sadd.s32 %s14, 1
      %s22 = ssub.s32 %s14, %s21
      %p23 = scmp.eq.s32.totalorder %s22, 0
      %s25 = sadd.s32 %s24, 1
      %s26 = scalar_select %p23, %s24, %s25
      %p29 = pneg %p23
      %p30 = scmp.eq.s32.totalorder %s14, 1
      %p31 = por %p29, %p30
      %p32 = scmp.ne.s32.totalorder %s24, %s27
      %p33 = scmp.eq.s32.totalorder %s14, 0
      %p34 = por %p32, %p33
      %p35 = scmp.ne.s32.totalorder %s24, %s27
      %p36 = scmp.eq.s32.totalorder %s19, 1
      %p37 = por %p35, %p36
      %p38 = scmp.ne.s32.totalorder %s27, %s28
      %p39 = scmp.eq.s32.totalorder %s19, 0
      %p40 = por %p38, %p39
      %p41 = scmp.ne.s32.totalorder %s27, %s28
      %p42 = scmp.eq.s32.totalorder %s20, 1
      %p43 = por %p41, %p42
      %p45 = scmp.ne.s32.totalorder %s28, %s44
      %p46 = scmp.eq.s32.totalorder %s20, 0
      %p47 = por %p45, %p46
      %s49 = sadd.s32 %s48, 1
      %p52 = scmp.eq.s32.totalorder %s14, 1
      %p53 = scmp.ne.s32.totalorder %s48, %s50
      %p54 = scmp.eq.s32.totalorder %s14, 0
      %p55 = por %p53, %p54
      %p56 = scmp.ne.s32.totalorder %s48, %s50
      %p57 = scmp.eq.s32.totalorder %s19, 1
      %p58 = por %p56, %p57
      %p59 = scmp.ne.s32.totalorder %s50, %s51
      %p60 = scmp.eq.s32.totalorder %s19, 0
      %p61 = por %p59, %p60
      %p62 = scmp.ne.s32.totalorder %s50, %s51
      %p63 = scmp.eq.s32.totalorder %s20, 1
      %p64 = por %p62, %p63
      %p66 = scmp.ne.s32.totalorder %s51, %s65
      %p67 = scmp.eq.s32.totalorder %s20, 0
      %p68 = por %p66, %p67
      %s70 = sadd.s32 %s69, 1
      %p73 = scmp.eq.s32.totalorder %s14, 1
      %p74 = scmp.ne.s32.totalorder %s69, %s71
      %p75 = scmp.eq.s32.totalorder %s14, 0
      %p76 = por %p74, %p75
      %p77 = scmp.ne.s32.totalorder %s69, %s71
      %p78 = scmp.eq.s32.totalorder %s19, 1
      %p79 = por %p77, %p78
      %p80 = scmp.ne.s32.totalorder %s71, %s72
      %p81 = scmp.eq.s32.totalorder %s19, 0
      %p82 = por %p80, %p81
      %p83 = scmp.ne.s32.totalorder %s71, %s72
      %p84 = scmp.eq.s32.totalorder %s20, 1
      %p85 = por %p83, %p84
      %p87 = scmp.ne.s32.totalorder %s72, %s86
      %p88 = scmp.eq.s32.totalorder %s20, 0
      %p89 = por %p87, %p88
      %s91 = sadd.s32 %s90, 1
      %p94 = scmp.eq.s32.totalorder %s14, 1
      %p95 = scmp.ne.s32.totalorder %s90, %s92
      %p96 = scmp.eq.s32.totalorder %s14, 0
      %p97 = por %p95, %p96
      %p98 = scmp.ne.s32.totalorder %s90, %s92
      %p99 = scmp.eq.s32.totalorder %s19, 1
      %p100 = por %p98, %p99
      %p101 = scmp.ne.s32.totalorder %s92, %s93
      %p102 = scmp.eq.s32.totalorder %s19, 0
      %p103 = por %p101, %p102
      %p104 = scmp.ne.s32.totalorder %s92, %s93
      %p105 = scmp.eq.s32.totalorder %s20, 1
      %p106 = por %p104, %p105
      %p108 = scmp.ne.s32.totalorder %s93, %s107
      %p109 = scmp.eq.s32.totalorder %s20, 0
      %p110 = por %p108, %p109
      %s112 = sadd.s32 %s111, 1
      %p115 = scmp.eq.s32.totalorder %s14, 1
      %p116 = scmp.ne.s32.totalorder %s111, %s113
      %p117 = scmp.eq.s32.totalorder %s14, 0
      %p118 = por %p116, %p117
      %p119 = scmp.ne.s32.totalorder %s111, %s113
      %p120 = scmp.eq.s32.totalorder %s19, 1
      %p121 = por %p119, %p120
      %p122 = scmp.ne.s32.totalorder %s113, %s114
      %p123 = scmp.eq.s32.totalorder %s19, 0
      %p124 = por %p122, %p123
      %p125 = scmp.ne.s32.totalorder %s113, %s114
      %p126 = scmp.eq.s32.totalorder %s20, 1
      %p127 = por %p125, %p126
      %p129 = scmp.ne.s32.totalorder %s114, %s128
      %p130 = scmp.eq.s32.totalorder %s20, 0
      %p131 = por %p129, %p130
      %s132 = ssub.s32 %s14, %s21
      %p133 = scmp.eq.s32.totalorder %s132, 0
      %s135 = sadd.s32 %s134, 1
      %s136 = scalar_select %p133, %s134, %s135
      %p139 = pneg %p133
      %p140 = scmp.eq.s32.totalorder %s14, 1
      %p141 = por %p139, %p140
      %p142 = scmp.ne.s32.totalorder %s134, %s137
      %p143 = scmp.eq.s32.totalorder %s14, 0
      %p144 = por %p142, %p143
      %p145 = scmp.ne.s32.totalorder %s134, %s137
      %p146 = scmp.eq.s32.totalorder %s19, 1
      %p147 = por %p145, %p146
      %p148 = scmp.ne.s32.totalorder %s137, %s138
      %p149 = scmp.eq.s32.totalorder %s19, 0
      %p150 = por %p148, %p149
      %p151 = scmp.ne.s32.totalorder %s137, %s138
      %p152 = scmp.eq.s32.totalorder %s20, 1
      %p153 = por %p151, %p152
      %p155 = scmp.ne.s32.totalorder %s138, %s154
      %p156 = scmp.eq.s32.totalorder %s20, 0
      %p157 = por %p155, %p156
      %p158 = scmp.le.s32.totalorder 1, %s14
      %p159 = scmp.lt.s32.totalorder %s14, 3
      %p160 = pnand %p158, %p159
      %p161 = pneg %p160
      // Predicated region
      $region9: #{tpu_custom_call.1} parent=5 // pred_check
        _
      $region10: #{tpu_custom_call.1} parent=5 // pred_check_branch
        %163 = sbr.rel (%p160) target = $region12
      $region11: #{tpu_custom_call.1} parent=5 // pred_region
        %s164 = ssub.s32 %s14, 1
        // Predicated region
        $region13: #{tpu_custom_call.1} parent=11 // pred_check
          %p165 = pneg %p61
        $region14: #{tpu_custom_call.1} parent=11 // pred_check_branch
          %167 = sbr.rel (%p165) target = $region16
        $region15: #{tpu_custom_call.1} parent=11 // pred_region
          _
        $region16: #{tpu_custom_call.1} parent=11 // pred_fallthru
          _
        // Predicated region
        $region17: #{tpu_custom_call.1} parent=11 // pred_check
          %p168 = pneg %p82
        $region18: #{tpu_custom_call.1} parent=11 // pred_check_branch
          %170 = sbr.rel (%p168) target = $region20
        $region19: #{tpu_custom_call.1} parent=11 // pred_region
          _
        $region20: #{tpu_custom_call.1} parent=11 // pred_fallthru
          _
        // Predicated region
        $region21: #{tpu_custom_call.1} parent=11 // pred_check
          %p171 = pneg %p103
        $region22: #{tpu_custom_call.1} parent=11 // pred_check_branch
          %173 = sbr.rel (%p171) target = $region24
        $region23: #{tpu_custom_call.1} parent=11 // pred_region
          _
        $region24: #{tpu_custom_call.1} parent=11 // pred_fallthru
          _
        // Predicated region
        $region25: #{tpu_custom_call.1} parent=11 // pred_check
          %p174 = pneg %p124
        $region26: #{tpu_custom_call.1} parent=11 // pred_check_branch
          %176 = sbr.rel (%p174) target = $region28
        $region27: #{tpu_custom_call.1} parent=11 // pred_region
          _
        $region28: #{tpu_custom_call.1} parent=11 // pred_fallthru
          _
      $region12: #{tpu_custom_call.1} parent=5 // pred_fallthru
        _
      %p177 = scmp.lt.s32.totalorder %s14, 2
      // Predicated region
      $region29: #{tpu_custom_call.1} parent=5 // pred_check
        %p178 = pneg %p177
      $region30: #{tpu_custom_call.1} parent=5 // pred_check_branch
        %180 = sbr.rel (%p178) target = $region32
      $region31: #{tpu_custom_call.1} parent=5 // pred_region
        // Predicated region
        $region33: #{tpu_custom_call.1} parent=31 // pred_check
          %p181 = pneg %p34
        $region34: #{tpu_custom_call.1} parent=31 // pred_check_branch
          %183 = sbr.rel (%p181) target = $region36
        $region35: #{tpu_custom_call.1} parent=31 // pred_region
          %p184 = scmp.lt.s32.totalorder %s14, 1
          %s185 = scalar_select %p184, %s14, 1
          %s186 = smul.addr %s185, 10
          %s187 = smul.addr %s186, 8
          %s188 = scalar_lea.vmem %s0, %s187
        $region36: #{tpu_custom_call.1} parent=31 // pred_fallthru
          _
      $region32: #{tpu_custom_call.1} parent=5 // pred_fallthru
        _
      %p189 = scmp.le.s32.totalorder 1, %s14
      %p190 = scmp.lt.s32.totalorder %s14, 3
      %p191 = pnand %p189, %p190
      %p192 = pneg %p191
      // Predicated region
      $region37: #{tpu_custom_call.1} parent=5 // pred_check
        _
      $region38: #{tpu_custom_call.1} parent=5 // pred_check_branch
        %194 = sbr.rel (%p191) target = $region40
      $region39: #{tpu_custom_call.1} parent=5 // pred_region
        %s195 = ssub.s32 %s14, 1
        %p196 = scmp.lt.s32.totalorder %s19, 1
        %s197 = scalar_select %p196, %s19, 1
        %s198 = smul.addr %s197, 10
        %s199 = smul.addr %s198, 8
        %s200 = scalar_lea.vmem %s0, %s199
        %p201 = pneg %p40
        %p202 = pneg %p37
        %p203 = pneg %p61
        %p204 = pneg %p58
        %p205 = pneg %p82
        %p206 = pneg %p79
        %p207 = pneg %p103
        %p208 = pneg %p100
        %p209 = pneg %p124
        %p210 = pneg %p121
        %p211 = pneg %p150
        %p212 = pneg %p147
        %s213 = sand.u32 %s137, 1
        %s214 = scalar_lea.sflag [#allocation3], %s213
        %s215 = sand.u32 %s137, 1
        %s216 = smul.addr %s215, 16
        %s217 = scalar_lea.vmem [#allocation2], %s216
        %p218 = scmp.lt.s32.totalorder %s19, 1
        %s219 = scalar_select %p218, %s19, 1
        %s220 = smul.addr %s219, 10
        %s221 = smul.addr %s220, 8
        %s222 = scalar_lea.vmem %s0, %s221
        %v223 = vld [vmem:[%s1] sm:$0xff]
        %v224 = vld [vmem:[%s222] sm:$0xff]
        %v225 = vld [vmem:[%s222 + $0x8] sm:$0xff]
        %v226 = vld [vmem:[%s222 + $0x10] sm:$0xff]
        %v227 = vld [vmem:[%s222 + $0x18] sm:$0xff]
        %v228 = vld [vmem:[%s222 + $0x20] sm:$0xff]
        %v229 = vld [vmem:[%s222 + $0x28] sm:$0xff]
        %v230 = vld [vmem:[%s222 + $0x30] sm:$0xff]
        %v231 = vld [vmem:[%s222 + $0x38] sm:$0xff]
        %v232 = vld [vmem:[%s222 + $0x40] sm:$0xf]
        %v233 = vld [vmem:[%s222 + $0x48] sm:$0xf]
        %v234 = vld [vmem:[%s2] sm:$0xff]
        %236 = vset.pattern.permute.xlu0 0
        %237 = vperm.xlu0 %236, %v234
        %v238 = vpop.permute.xlu0 %237
        %vm240 = vcmask 293888
        %v242 = vsel %vm240, %v223, 0
        %vm244 = vcmask 1043456
        %v246 = vsel %vm244, %v232, 0
        %v249 = vsel %vm244, %v233, 0
        %251 = vmatprep.subr.mxu0 0.0
        %252 = vmatpush1.msra.mxu0 0.0
        %253 = vmatprep.subr.mxu0 0.0
        %254 = vmatpush1.msra.mxu0 0.0
        %255 = vmatprep.subr.mxu0 0.0
        %256 = vmatpush1.msra.mxu0 0.0
        %257 = vmatprep.subr.mxu0 0.0
        %258 = vmatpush1.msra.mxu0 0.0
        %259 = vmatprep.subr.mxu0 0.0
        %260 = vmatpush1.msra.mxu0 0.0
        %261 = vmatprep.subr.mxu0 0.0
        %262 = vmatpush1.msra.mxu0 0.0
        %263 = vmatprep.subr.mxu0 0.0
        %264 = vmatpush1.msra.mxu0 0.0
        %265 = vmatprep.subr.mxu0 0.0
        %266 = vmatpush1.msra.mxu0 0.0
        %267 = vmatprep.subr.mxu0 0.0
        %268 = vmatpush1.msra.mxu0 0.0
        %269 = vmatprep.subr.mxu0 0.0
        %270 = vmatpush1.msra.mxu0 0.0
        %271 = vmatprep.subr.mxu0 0.0
        %272 = vmatpush1.msra.mxu0 0.0
        %273 = vmatprep.subr.mxu0 %v249
        %274 = vmatpush1.msra.mxu0 %v246
        %275 = vmatprep.subr.mxu0 %v231
        %276 = vmatpush1.msra.mxu0 %v230
        %277 = vmatprep.subr.mxu0 %v229
        %278 = vmatpush1.msra.mxu0 %v228
        %279 = vmatprep.subr.mxu0 %v227
        %280 = vmatpush1.msra.mxu0 %v226
        %281 = vmatprep.subr.mxu0 %v225
        %282 = vmatpush1.msra.mxu0 %v224
        %283 = vmatprep.subr.mxu0 0.0
        %284 = vmatpush2.msra.mxu0 0.0
        %285 = vmatprep.subr.mxu0 0.0
        %286 = vmatpush2.msra.mxu0 0.0
        %287 = vmatprep.subr.mxu0 0.0
        %288 = vmatpush2.msra.mxu0 0.0
        %289 = vmatprep.subr.mxu0 0.0
        %290 = vmatpush2.msra.mxu0 0.0
        %291 = vmatprep.subr.mxu0 0.0
        %292 = vmatpush2.msra.mxu0 0.0
        %293 = vmatprep.subr.mxu0 0.0
        %294 = vmatpush2.msra.mxu0 0.0
        %295 = vmatprep.subr.mxu0 0.0
        %296 = vmatpush2.msra.mxu0 0.0
        %297 = vmatprep.subr.mxu0 0.0
        %298 = vmatpush2.msra.mxu0 0.0
        %299 = vmatprep.subr.mxu0 0.0
        %300 = vmatpush2.msra.mxu0 0.0
        %301 = vmatprep.subr.mxu0 0.0
        %302 = vmatpush2.msra.mxu0 0.0
        %303 = vmatprep.subr.mxu0 0.0
        %304 = vmatpush2.msra.mxu0 0.0
        %305 = vmatprep.subr.mxu0 0.0
        %306 = vmatpush2.msra.mxu0 0.0
        %307 = vmatprep.subr.mxu0 0.0
        %308 = vmatpush2.msra.mxu0 0.0
        %309 = vmatprep.subr.mxu0 0.0
        %310 = vmatpush2.msra.mxu0 0.0
        %311 = vmatprep.subr.mxu0 0.0
        %312 = vmatpush2.msra.mxu0 0.0
        %313 = vmatprep.subr.mxu0 0.0
        %314 = vmatpush2.msra.mxu0 0.0
        %315 = vmatprep.mubr.f32.mxu0 0.0
        %316 = vmatmul.mubr.f32.gmra.mxu0 %v242
        %v317 = vpop.f32.mrf.mxu0
        %v318 = vadd.f32 %v238, %v317
        %v319 = vpop.f32.mrf.mxu0
        %v320 = vadd.f32 %v238, %v319
        %321 = vdwg.mxu0
        %v322 = vadd.f32 %v318, %v320
        %323 = vadd.xlane.f32.xlu0 %v322
        %v324 = vpop.xlane.xlu0 %323
        %v325 = vrot.slane %v324, 4
        %v326 = vadd.f32 %v324, %v325
        %v327 = vrot.slane %v326, 2
        %v328 = vadd.f32 %v326, %v327
        %v329 = vrot.slane %v328, 1
        %v330 = vadd.f32 %v328, %v329
        %s331 = vtos %v330
        %v332 = vstv %s331
        %v333 = vrcp.pop 2048.0
        %v334 = vmul.f32 %v332, %v333
        %v335 = vsub.f32 %v318, %v334
        %v336 = vsub.f32 %v320, %v334
        %v337 = vmul.f32 %v335, %v335
        %v338 = vmul.f32 %v336, %v336
        %v339 = vadd.f32 %v337, %v338
        %340 = vadd.xlane.f32.xlu0 %v339
        %v341 = vpop.xlane.xlu0 %340
        %v342 = vrot.slane %v341, 4
        %v343 = vadd.f32 %v341, %v342
        %v344 = vrot.slane %v343, 2
        %v345 = vadd.f32 %v343, %v344
        %v346 = vrot.slane %v345, 1
        %v347 = vadd.f32 %v345, %v346
        %s348 = vtos %v347
        %v349 = vstv %s348
        %v350 = vmul.f32 %v349, %v333
        %v351 = vadd.f32 %v350, 1e-05
        %v352 = vrsqrt.pop %v351
        %v353 = vmul.f32 %v335, %v352
        %v354 = vmul.f32 %v336, %v352
        %v355 = vld [vmem:[%s3] sm:$0xff]
        %v356 = vld [vmem:[%s3 + $0x8] sm:$0xff]
        %v357 = vmul.f32 %v353, %v355
        %v358 = vmul.f32 %v354, %v356
        %v359 = vld [vmem:[%s4] sm:$0xff]
        %v360 = vld [vmem:[%s4 + $0x8] sm:$0xff]
        %v361 = vadd.f32 %v357, %v359
        %v362 = vadd.f32 %v358, %v360
        %vm363 = vcmp.gt.f32.partialorder %v361, 0.0
        %vm364 = vcmp.gt.f32.partialorder %v362, 0.0
        %v365 = vmul.f32 %v361, 0.1
        %v366 = vmul.f32 %v362, 0.1
        %v367 = vsel %vm363, %v361, %v365
        %v368 = vsel %vm364, %v362, %v366
        %369 = vst [vmem:[%s217] sm:$0xff] %v367
        %370 = vst [vmem:[%s217 + $0x8] sm:$0xff] %v368
        %s371 = sand.u32 %s137, 1
        %s372 = scalar_lea.sflag [#allocation3], %s371
        %s373 = sand.u32 %s137, 1
        %s374 = smul.addr %s373, 16
        %s375 = scalar_lea.vmem [#allocation2], %s374
        // Predicated region
        $region41: #{tpu_custom_call.1} parent=39 // pred_check
          %p376 = pneg %p147
        $region42: #{tpu_custom_call.1} parent=39 // pred_check_branch
          %378 = sbr.rel (%p376) target = $region44
        $region43: #{tpu_custom_call.1} parent=39 // pred_region
          %s380 = ssub.s32 256, 256
          %381 = vsyncadd %s372, %s380
          %s382 = smul.addr %s19, 2
          %s383 = smul.addr %s382, 128
          %s384 = scalar_lea.hbm %s5, %s383
          %s386 = sshll.u32 %s375, 4
          %s387 = int_to_ptr.vmem [resolvable:$true] %s386
          %389 = dma.vmem_to_hbm [thread:$0]  %s387, 256, %s384, %s372
        $region44: #{tpu_custom_call.1} parent=39 // pred_fallthru
          _
      $region40: #{tpu_custom_call.1} parent=5 // pred_fallthru
        _
      %p390 = scmp.le.s32.totalorder 2, %s14
      // Predicated region
      $region45: #{tpu_custom_call.1} parent=5 // pred_check
        %p391 = pneg %p390
      $region46: #{tpu_custom_call.1} parent=5 // pred_check_branch
        %393 = sbr.rel (%p391) target = $region48
      $region47: #{tpu_custom_call.1} parent=5 // pred_region
        %s394 = ssub.s32 %s14, 2
        // Predicated region
        $region49: #{tpu_custom_call.1} parent=47 // pred_check
          %p395 = pneg %p153
        $region50: #{tpu_custom_call.1} parent=47 // pred_check_branch
          %397 = sbr.rel (%p395) target = $region52
        $region51: #{tpu_custom_call.1} parent=47 // pred_region
          %s398 = sand.u32 %s138, 1
          %s399 = scalar_lea.sflag [#allocation3], %s398
          %s400 = sand.u32 %s138, 1
          %s401 = smul.addr %s400, 16
          %s402 = scalar_lea.vmem [#allocation2], %s401
          %403 = dma.done %s399, 256
        $region52: #{tpu_custom_call.1} parent=47 // pred_fallthru
          _
      $region48: #{tpu_custom_call.1} parent=5 // pred_fallthru
        _
    $region6: #{tpu_custom_call.1} parent=1 // loop_footer
      %s18 = sadd.s32 1, %s14
    $region7: #{tpu_custom_call.1} parent=1 // loop_footer_branch
      %13 = sbr.rel target = $region3
    $region8: #{tpu_custom_call.1} parent=1 // loop_exit
      _
    %404 = vsyncpa [#allocation3], 1
    %s405 = scalar_lea.sflag [#allocation3], 1
    %406 = vsyncpa %s405, 1

</llo_original>
